<compile_context>
chip_gen: v5e
topology: v5e:2x2
jax: 0.10.0
libtpu: 0.0.40
codegen_flags: <defaults>
</compile_context>

<pallas_src>
import jax
import jax.numpy as jnp
from jax.experimental import pallas as pl
from jax.experimental.pallas import tpu as pltpu


def _lm_criterion_kernel(tgt_ref, mask_ref, inp_ref, out_ref):
    """One grid step == one block of R flattened (b, t) positions.

    tgt_ref : (R, 1) int32   target ids   (VMEM column block)
    mask_ref: (R, 1) float32 mask weights (VMEM column block)
    inp_ref : (R, V) log-probabilities    (native dtype, streamed block)
    out_ref : (1, 1) float32 per-block partial sum of (-logp[target] * mask)
    """
    r, v = inp_ref.shape
    chunk = inp_ref[...]                                              # (R, V)
    lane_ids = jax.lax.broadcasted_iota(jnp.int32, (r, v), 1)
    # select (NOT multiply-by-one-hot): immune to -inf log-probs at non-target lanes
    picked = jnp.where(lane_ids == tgt_ref[...], chunk, jnp.zeros((), chunk.dtype))
    # exactly one non-zero per row -> the sum is an exact gather even in bf16;
    # cast to f32 once, on the gathered column only (v5e has no bf16 VALU)
    gathered = jnp.sum(picked, axis=1, keepdims=True).astype(jnp.float32)   # (R, 1)
    nll = -gathered * mask_ref[...]                                   # (R, 1)
    # per-block partial sum: 4-byte store per step, wrapper reduces B*T/R values
    out_ref[...] = jnp.sum(nll, keepdims=True)                        # (1, 1)


def _round_up(x, m):
    return ((x + m - 1) // m) * m


def _pick_row_block(bt, v, itemsize):
    """Rows per grid step: power of two, multiple of the dtype sublane tile,
    double-buffered (R, V) block <= ~16 MiB, preferring a divisor of B*T."""
    sublane = 8 if itemsize >= 4 else 32 // itemsize                  # 8 f32 / 16 bf16
    budget = 16 * 1024 * 1024
    candidates = [c for c in (512, 256, 128, 64, 32, 16, 8)
                  if c >= sublane and 2 * c * v * itemsize <= budget]
    if not candidates:
        candidates = [sublane]
    for c in candidates:                       # largest divisor -> no padding copy
        if bt % c == 0:
            return c
    return max(sublane, min(candidates[0], _round_up(bt, sublane)))


def language_model_criterion(inp, target, mask):
    """Pallas implementation of LanguageModelCriterion.forward.

    inp:    (B, T, V) float32 or bfloat16 log-probabilities
    target: (B, T')   integer token ids   (T' >= T)
    mask:   (B, T')   float mask / weights
    """
    B, T, V = inp.shape
    # glue: PyTorch does target[:, :input.size(1)] / mask[:, :input.size(1)]
    target = target[:, :T]
    mask = mask[:, :T]

    BT = B * T
    itemsize = jnp.dtype(inp.dtype).itemsize
    r = _pick_row_block(BT, V, itemsize)
    bt_pad = _round_up(BT, r)
    num_blocks = bt_pad // r

    inp2d = inp.reshape(BT, V)                                        # free reshape
    # clamp out-of-range ids so the lane compare stays valid (see NOTE in header)
    tgt_col = jnp.clip(target.reshape(BT, 1).astype(jnp.int32), 0, V - 1)
    mask_col = mask.reshape(BT, 1).astype(jnp.float32)

    pad = bt_pad - BT
    if pad:                                    # padded rows: mask 0 -> contribution 0
        inp2d = jnp.pad(inp2d, ((0, pad), (0, 0)))
        tgt_col = jnp.pad(tgt_col, ((0, pad), (0, 0)))
        mask_col = jnp.pad(mask_col, ((0, pad), (0, 0)))

    partials = pl.pallas_call(
        _lm_criterion_kernel,
        out_shape=jax.ShapeDtypeStruct((num_blocks, 1), jnp.float32),
        grid=(num_blocks,),
        in_specs=[
            pl.BlockSpec((r, 1), lambda i: (i, 0)),                   # target ids
            pl.BlockSpec((r, 1), lambda i: (i, 0)),                   # mask
            pl.BlockSpec((r, V), lambda i: (i, 0)),                   # log-prob block
        ],
        out_specs=pl.BlockSpec((1, 1), lambda i: (i, 0)),             # partial sums
        compiler_params=pltpu.CompilerParams(
            dimension_semantics=("parallel",),        # row blocks fully independent
            vmem_limit_bytes=32 * 1024 * 1024,
        ),
    )(tgt_col, mask_col, inp2d)

    # tiny O(B*T / R) reduction + mask normalization in the wrapper (torch semantics)
    return jnp.sum(partials) / jnp.sum(mask_col)


def _reference(inp, target, mask):
    B, T, V = inp.shape
    t = target[:, :T].astype(jnp.int32)
    m = mask[:, :T].astype(jnp.float32)
    g = jnp.take_along_axis(inp.astype(jnp.float32), t[:, :, None], axis=2)[..., 0]
    return jnp.sum(-g * m) / jnp.sum(m)


if __name__ == "__main__":
    key = jax.random.PRNGKey(0)
    ok = True

    # --- Case 1: small vocab, f32, with -inf log-probs at a non-target vocab entry
    B, T, V = 2, 8, 32
    T_full = T + 2
    k1, k2, k3 = jax.random.split(key, 3)
    logits = jax.random.normal(k1, (B, T, V), dtype=jnp.float32)
    inp = jax.nn.log_softmax(logits, axis=-1)
    inp = inp.at[:, :, 0].set(-jnp.inf)                 # targets never point here
    target = jax.random.randint(k2, (B, T_full), 1, V, dtype=jnp.int32)
    pos = jnp.arange(T_full)[None, :]
    mask = (pos < jnp.array([[7], [5]], dtype=jnp.int32)).astype(jnp.float32)

    out1 = jax.block_until_ready(language_model_criterion(inp, target, mask))
    ref1 = _reference(inp, target, mask)
    ok &= bool(jnp.allclose(out1, ref1, rtol=1e-5, atol=1e-5))

    # --- Case 2: multi-128-lane vocab, bf16 input (16-sublane row blocks)
    B2, T2, V2 = 2, 8, 384
    k4, k5, k6 = jax.random.split(k3, 3)
    logits2 = jax.random.normal(k4, (B2, T2, V2), dtype=jnp.float32)
    inp2 = jax.nn.log_softmax(logits2, axis=-1).astype(jnp.bfloat16)
    target2 = jax.random.randint(k5, (B2, T2 + 2), 0, V2, dtype=jnp.int32)
    mask2 = (jnp.arange(T2 + 2)[None, :] < jnp.array([[8], [3]])).astype(jnp.float32)

    out2 = jax.block_until_ready(language_model_criterion(inp2, target2, mask2))
    ref2 = _reference(inp2, target2, mask2)
    ok &= bool(jnp.allclose(out2, ref2, rtol=1e-4, atol=1e-4))

    # --- Case 3: B*T not a multiple of the row block (exercises the padding path)
    B3, T3, V3 = 3, 5, 50
    k7, k8, _ = jax.random.split(k6, 3)
    logits3 = jax.random.normal(k7, (B3, T3, V3), dtype=jnp.float32)
    inp3 = jax.nn.log_softmax(logits3, axis=-1)
    target3 = jax.random.randint(k8, (B3, T3 + 1), 0, V3, dtype=jnp.int32)
    mask3 = (jnp.arange(T3 + 1)[None, :] < jnp.array([[5], [2], [4]])).astype(jnp.float32)

    out3 = jax.block_until_ready(language_model_criterion(inp3, target3, mask3))
    ref3 = _reference(inp3, target3, mask3)
    ok &= bool(jnp.allclose(out3, ref3, rtol=1e-5, atol=1e-5))

    assert ok, (out1, ref1, out2, ref2, out3, ref3)
    print("KERNEL_OK")
</pallas_src>

<mosaic_0001>
module attributes {stable_mosaic.version = 11 : i64} {
  func.func @_lm_criterion_kernel(%arg0: i32, %arg1: memref<16x1xi32, #tpu.memory_space<vmem>>, %arg2: memref<16x1xf32, #tpu.memory_space<vmem>>, %arg3: memref<16x32xf32, #tpu.memory_space<vmem>>, %arg4: memref<1x1xf32, #tpu.memory_space<vmem>>) attributes {dimension_semantics = [#tpu.dimension_semantics<parallel>], iteration_bounds = array<i64: 1>, scalar_prefetch = 0 : i64, scratch_operands = 0 : i64, tpu.core_type = #tpu.core_type<tc>, window_params = [{transform_indices = @transform_0, window_bounds = array<i64: 16, 1>}, {transform_indices = @transform_1, window_bounds = array<i64: 16, 1>}, {transform_indices = @transform_2, window_bounds = array<i64: 16, 32>}, {transform_indices = @transform_3, window_bounds = array<i64: 1, 1>}]} {
    %c0 = arith.constant 0 : index
    %c0_0 = arith.constant 0 : index
    %0 = vector.load %arg3[%c0, %c0_0] : memref<16x32xf32, #tpu.memory_space<vmem>>, vector<16x32xf32>
    %1 = tpu.iota {dimensions = array<i32: 1>} : vector<16x32xi32>
    %c0_1 = arith.constant 0 : index
    %c0_2 = arith.constant 0 : index
    %2 = vector.load %arg1[%c0_1, %c0_2] : memref<16x1xi32, #tpu.memory_space<vmem>>, vector<16x1xi32>
    %3 = vector.broadcast %2 : vector<16x1xi32> to vector<16x32xi32>
    %4 = arith.cmpi eq, %1, %3 : vector<16x32xi32>
    %cst = arith.constant 0.000000e+00 : f32
    %5 = vector.broadcast %cst : f32 to vector<16x32xf32>
    %6 = arith.select %4, %0, %5 : vector<16x32xi1>, vector<16x32xf32>
    %cst_3 = arith.constant dense<0.000000e+00> : vector<16xf32>
    %7 = vector.multi_reduction <add>, %6, %cst_3 [1] : vector<16x32xf32> to vector<16xf32>
    %8 = vector.shape_cast %7 : vector<16xf32> to vector<16x1xf32>
    %cst_4 = arith.constant 0.000000e+00 : f32
    %9 = vector.broadcast %cst_4 : f32 to vector<16x1xf32>
    %10 = arith.subf %9, %8 : vector<16x1xf32>
    %c0_5 = arith.constant 0 : index
    %c0_6 = arith.constant 0 : index
    %11 = vector.load %arg2[%c0_5, %c0_6] : memref<16x1xf32, #tpu.memory_space<vmem>>, vector<16x1xf32>
    %12 = arith.mulf %10, %11 : vector<16x1xf32>
    %13 = vector.shape_cast %12 : vector<16x1xf32> to vector<1x16x1xf32>
    %cst_7 = arith.constant dense<0.000000e+00> : vector<1xf32>
    %14 = vector.multi_reduction <add>, %13, %cst_7 [1, 2] : vector<1x16x1xf32> to vector<1xf32>
    %15 = vector.shape_cast %14 : vector<1xf32> to vector<1x1x1xf32>
    %16 = vector.extract %15[0, 0, 0] : f32 from vector<1x1x1xf32>
    %17 = vector.broadcast %16 : f32 to vector<1x1xf32>
    %c0_8 = arith.constant 0 : index
    %c0_9 = arith.constant 0 : index
    %18 = vector.load %arg4[%c0_8, %c0_9] : memref<1x1xf32, #tpu.memory_space<vmem>>, vector<1x1xf32>
    tpu.vector_store %arg4[%c0_8, %c0_9], %17 {strides = array<i32>} : memref<1x1xf32, #tpu.memory_space<vmem>>, vector<1x1xf32>,
    return
  }
  func.func @transform_0(%arg0: i32) -> (i32, i32) {
    %c0_i32 = arith.constant 0 : i32
    %c0_i32_0 = arith.constant 0 : i32
    return %arg0, %c0_i32 : i32, i32
  }
  func.func @transform_1(%arg0: i32) -> (i32, i32) {
    %c0_i32 = arith.constant 0 : i32
    %c0_i32_0 = arith.constant 0 : i32
    return %arg0, %c0_i32 : i32, i32
  }
  func.func @transform_2(%arg0: i32) -> (i32, i32) {
    %c0_i32 = arith.constant 0 : i32
    %c0_i32_0 = arith.constant 0 : i32
    return %arg0, %c0_i32 : i32, i32
  }
  func.func @transform_3(%arg0: i32) -> (i32, i32) {
    %c0_i32 = arith.constant 0 : i32
    %c0_i32_0 = arith.constant 0 : i32
    return %arg0, %c0_i32 : i32, i32
  }
}

</mosaic_0001>

<llo_original>
// kernel: tpu_custom_call.1
$region0: #{tpu_custom_call.1}
  #allocation0 [shape = 'u32[]', space=smem, size = 0x4, offset = 0x4, fixed_abs, tag = 'smem constant byte address 0x4 - core index']
  #allocation1 [shape = 'u32[72,128]{1,0:T(1,128)}', space=vmem, size = 0x9000, scoped, tag = 'internal scratch']
  %s0 = inlined_call_operand.vmem [shape: s32[16,1], index: 0, kind: input, shape index: {}]
  %s1 = inlined_call_operand.vmem [shape: f32[16,1], index: 1, kind: input, shape index: {}]
  %s2 = inlined_call_operand.vmem [shape: f32[16,32], index: 2, kind: input, shape index: {}]
  %s3 = inlined_call_operand.hbm [shape: f32[1,1], index: 3, kind: output, shape index: {}]
  %s4 = sld [smem:[#allocation0]]
  $region22: #{tpu_custom_call.1} parent=0
    _
  %s6 = ssub.s32 1, %s4
  %s7 = scalar_select 0, %s6, %s4
  $region1: #{tpu_custom_call.1} parent=0
    #allocation2 [shape = 'u8[512]{0}', space=vmem, size = 0x400, scoped, tag = 'output window, operand 0, single buffered']
    #allocation3 [shape = 's32[1]{0}', space=sflag, size = 0x4, scoped, tag = 'scoped memory for tpu_custom_call.1']
    %8 = vsyncpa [#allocation3], 0
    // Predicated region
    $region2: #{tpu_custom_call.1} parent=1 // pred_check
      _
    $region3: #{tpu_custom_call.1} parent=1 // pred_check_branch
      %10 = sbr.rel (0) target = $region5
    $region4: #{tpu_custom_call.1} parent=1 // pred_region
      _
    $region5: #{tpu_custom_call.1} parent=1 // pred_fallthru
      _
    // Predicated region
    $region6: #{tpu_custom_call.1} parent=1 // pred_check
      _
    $region7: #{tpu_custom_call.1} parent=1 // pred_check_branch
      %12 = sbr.rel (0) target = $region9
    $region8: #{tpu_custom_call.1} parent=1 // pred_region
      _
    $region9: #{tpu_custom_call.1} parent=1 // pred_fallthru
      _
    // Predicated region
    $region10: #{tpu_custom_call.1} parent=1 // pred_check
      _
    $region11: #{tpu_custom_call.1} parent=1 // pred_check_branch
      %14 = sbr.rel (0) target = $region13
    $region12: #{tpu_custom_call.1} parent=1 // pred_region
      _
    $region13: #{tpu_custom_call.1} parent=1 // pred_fallthru
      _
    %v15 = vld [vmem:[%s2] sm:$0xff]
    %v16 = vld [vmem:[%s2 + $0x8] sm:$0xff]
    %v17 = vlaneseq
    %v18 = vand.u32 %v17, 127
    %v19 = vld [vmem:[%s0] sm:$0xff]
    %v20 = vld [vmem:[%s0 + $0x8] sm:$0xff]
    %21 = vset.pattern.permute.xlu0 0
    %22 = vperm.xlu0 %21, %v19
    %v23 = vpop.permute.xlu0 %22
    %24 = vset.pattern.permute.xlu0 0
    %25 = vperm.xlu0 %24, %v20
    %v26 = vpop.permute.xlu0 %25
    %vm27 = vcmp.eq.s32.totalorder %v18, %v23
    %vm28 = vcmp.eq.s32.totalorder %v18, %v26
    %v29 = vsel %vm27, %v15, 0.0
    %v30 = vsel %vm28, %v16, 0.0
    %vm31 = vcmask 261120
    %v32 = vsel %vm31, %v29, 0.0
    %33 = vadd.xlane.f32.xlu0 %v32
    %v34 = vpop.xlane.xlu0 %33
    %v35 = vsel %vm31, %v30, 0.0
    %36 = vadd.xlane.f32.xlu0 %v35
    %v37 = vpop.xlane.xlu0 %36
    %v38 = vsub.f32 0.0, %v34
    %v39 = vsub.f32 0.0, %v37
    %v40 = vld [vmem:[%s1] sm:$0xff]
    %v41 = vld [vmem:[%s1 + $0x8] sm:$0xff]
    %v42 = vmul.f32 %v38, %v40
    %v43 = vmul.f32 %v39, %v41
    %vm44 = vcmask 7168
    %v45 = vsel %vm44, %v42, 0.0
    %v46 = vsel %vm44, %v43, 0.0
    %v47 = vadd.f32 %v45, %v46
    %48 = vadd.xlane.f32.xlu0 %v47
    %v49 = vpop.xlane.xlu0 %48
    %v50 = vrot.slane %v49, 4
    %v51 = vadd.f32 %v49, %v50
    %v52 = vrot.slane %v51, 2
    %v53 = vadd.f32 %v51, %v52
    %v54 = vrot.slane %v53, 1
    %v55 = vadd.f32 %v53, %v54
    %s56 = vtos %v55
    %v57 = vstv %s56
    %vm58 = vcmask 0
    %59 = vst.msk [vmem:[#allocation2] sm:$0x1] %vm58, %v57
    // Predicated region
    $region14: #{tpu_custom_call.1} parent=1 // pred_check
      _
    $region15: #{tpu_custom_call.1} parent=1 // pred_check_branch
      %61 = sbr.rel (0) target = $region17
    $region16: #{tpu_custom_call.1} parent=1 // pred_region
      %63 = vsyncadd [#allocation3], 0
      %s65 = sshll.u32 [#allocation2], 4
      %s66 = int_to_ptr.vmem [resolvable:$true] %s65
      %s67 = sshll.u32 %s3, 4
      %s68 = int_to_ptr.hbm [resolvable:$true] %s67
      %70 = dma.vmem_to_hbm [thread:$0]  %s66, 16, %s68, [#allocation3]
    $region17: #{tpu_custom_call.1} parent=1 // pred_fallthru
      _
    // Predicated region
    $region18: #{tpu_custom_call.1} parent=1 // pred_check
      _
    $region19: #{tpu_custom_call.1} parent=1 // pred_check_branch
      %72 = sbr.rel (0) target = $region21
    $region20: #{tpu_custom_call.1} parent=1 // pred_region
      %74 = dma.done [#allocation3], 16
    $region21: #{tpu_custom_call.1} parent=1 // pred_fallthru
      _
    %75 = vsyncpa [#allocation3], 1

</llo_original>
